<compile_context>
chip_gen: v5e
topology: v5e:2x2
jax: 0.10.0
libtpu: 0.0.40
codegen_flags: <defaults>
</compile_context>

<pallas_src>
import math

import jax
import jax.numpy as jnp
from jax.experimental import pallas as pl
from jax.experimental.pallas import tpu as pltpu

BN_EPS = 1e-5
_VMEM_LIMIT = 48 * 1024 * 1024  # stay comfortably inside v7x's 64 MiB VMEM


def _round_up(a, b):
    return (a + b - 1) // b * b


def _pick_tile(padded, candidates):
    for c in candidates:
        if padded % c == 0:
            return c
    return candidates[-1]


# --------------------------------------------------------------------------
# Pass 1: y = (x + h0) @ W  (K-tiled, bf16 MXU feed, f32 accumulation)
#         + global per-column sum / sum-of-squares for BatchNorm statistics.
# --------------------------------------------------------------------------
def _mm_stats_kernel(x_ref, h0_ref, w_ref, y_ref, sum_ref, sq_ref):
    i = pl.program_id(0)          # row-tile index
    k = pl.program_id(1)          # K-tile index (reduction axis, last in grid)
    nk = pl.num_programs(1)

    @pl.when(jnp.logical_and(i == 0, k == 0))
    def _init_stats():
        sum_ref[...] = jnp.zeros_like(sum_ref)
        sq_ref[...] = jnp.zeros_like(sq_ref)

    @pl.when(k == 0)
    def _init_acc():
        y_ref[...] = jnp.zeros_like(y_ref)

    # Residual add in f32 (VPU), then cast to the MXU compute dtype (bf16 on
    # v6e/v7x; f32 path also supported).  f32 accumulation on the MXU.
    support = (x_ref[...] + h0_ref[...]).astype(w_ref.dtype)
    y_ref[...] += jnp.dot(support, w_ref[...],
                          preferred_element_type=jnp.float32)

    @pl.when(k == nk - 1)
    def _accumulate_stats():
        y = y_ref[...]                                  # full f32 row-tile
        sum_ref[...] += jnp.sum(y, axis=0, keepdims=True)
        sq_ref[...] += jnp.sum(y * y, axis=0, keepdims=True)


# --------------------------------------------------------------------------
# Pass 2: BatchNorm1d apply (training mode): (y - mean) * rsqrt(var+eps) * g + b
# --------------------------------------------------------------------------
def _bn_apply_kernel(y_ref, mean_ref, var_ref, gamma_ref, beta_ref, out_ref):
    inv_std = jax.lax.rsqrt(var_ref[...] + BN_EPS)      # (1, Npad) -> EUP slot
    scale = gamma_ref[...] * inv_std
    shift = beta_ref[...] - mean_ref[...] * scale
    out_ref[...] = (y_ref[...] * scale + shift).astype(out_ref.dtype)


def residual_layer(x, h0, weight, gamma, beta, *,
                   compute_dtype=jnp.bfloat16, tm_max=256):
    """Pallas TPU implementation of residualayer.forward (training-mode BN)."""
    n, in_f = x.shape
    out_f = weight.shape[1]
    f32 = jnp.float32

    # ---- tile sizes & lane/sublane-dense padding -------------------------
    n_pad = _round_up(n, 8)
    tm = _pick_tile(n_pad, [tm_max, 128, 64, 32, 16, 8])
    k_pad = _round_up(in_f, 128)
    tk = _pick_tile(k_pad, [512, 256, 128])
    n_out_pad = _round_up(out_f, 128)

    # Zero-padded rows/cols contribute exactly zero to the matmul and to the
    # column sums, so global BN statistics stay correct (we divide by real n).
    xp = jnp.zeros((n_pad, k_pad), f32).at[:n, :in_f].set(x.astype(f32))
    h0p = jnp.zeros((n_pad, k_pad), f32).at[:n, :in_f].set(h0.astype(f32))
    wp = jnp.zeros((k_pad, n_out_pad), compute_dtype).at[:in_f, :out_f].set(
        weight.astype(compute_dtype))
    gp = jnp.ones((1, n_out_pad), f32).at[0, :out_f].set(gamma.astype(f32))
    bp = jnp.zeros((1, n_out_pad), f32).at[0, :out_f].set(beta.astype(f32))

    # ---- pass 1: matmul + global column stats ----------------------------
    y, col_sum, col_sq = pl.pallas_call(
        _mm_stats_kernel,
        out_shape=(
            jax.ShapeDtypeStruct((n_pad, n_out_pad), f32),
            jax.ShapeDtypeStruct((1, n_out_pad), f32),
            jax.ShapeDtypeStruct((1, n_out_pad), f32),
        ),
        grid_spec=pltpu.PrefetchScalarGridSpec(
            num_scalar_prefetch=0,
            grid=(n_pad // tm, k_pad // tk),
            in_specs=[
                pl.BlockSpec((tm, tk), lambda i, k: (i, k)),          # x
                pl.BlockSpec((tm, tk), lambda i, k: (i, k)),          # h0
                pl.BlockSpec((tk, n_out_pad), lambda i, k: (k, 0)),   # weight
            ],
            out_specs=[
                pl.BlockSpec((tm, n_out_pad), lambda i, k: (i, 0)),   # y
                pl.BlockSpec((1, n_out_pad), lambda i, k: (0, 0)),    # sum
                pl.BlockSpec((1, n_out_pad), lambda i, k: (0, 0)),    # sumsq
            ],
        ),
        compiler_params=pltpu.CompilerParams(
            # Row axis carries the global-stats accumulator -> "arbitrary".
            dimension_semantics=("arbitrary", "arbitrary"),
            vmem_limit_bytes=_VMEM_LIMIT,
        ),
    )(xp, h0p, wp)

    # Tiny (1, Npad) reductions finalize in XLA; f32 accumulators throughout.
    inv_n = jnp.float32(1.0 / n)
    mean = col_sum * inv_n
    var = jnp.maximum(col_sq * inv_n - mean * mean, 0.0)   # biased (BN train)

    # ---- pass 2: normalize (parallel over row tiles) ----------------------
    out_p = pl.pallas_call(
        _bn_apply_kernel,
        out_shape=jax.ShapeDtypeStruct((n_pad, n_out_pad), f32),
        grid_spec=pltpu.PrefetchScalarGridSpec(
            num_scalar_prefetch=0,
            grid=(n_pad // tm,),
            in_specs=[
                pl.BlockSpec((tm, n_out_pad), lambda i: (i, 0)),      # y
                pl.BlockSpec((1, n_out_pad), lambda i: (0, 0)),       # mean
                pl.BlockSpec((1, n_out_pad), lambda i: (0, 0)),       # var
                pl.BlockSpec((1, n_out_pad), lambda i: (0, 0)),       # gamma
                pl.BlockSpec((1, n_out_pad), lambda i: (0, 0)),       # beta
            ],
            out_specs=pl.BlockSpec((tm, n_out_pad), lambda i: (i, 0)),
        ),
        compiler_params=pltpu.CompilerParams(
            dimension_semantics=("parallel",),   # v7x: both TensorCores
            vmem_limit_bytes=_VMEM_LIMIT,
        ),
    )(y, mean, var, gp, bp)

    return out_p[:n, :out_f]


def reference(x, h0, weight, gamma, beta):
    support = x + h0
    out = support @ weight
    mean = out.mean(axis=0, keepdims=True)
    var = ((out - mean) ** 2).mean(axis=0, keepdims=True)
    return (out - mean) / jnp.sqrt(var + BN_EPS) * gamma + beta


if __name__ == "__main__":
    key = jax.random.PRNGKey(0)
    k_x, k_h0, k_w = jax.random.split(key, 3)

    N = 8             # batch / number of nodes
    IN_FEATURES = 32
    OUT_FEATURES = 32

    x = jax.random.normal(k_x, (N, IN_FEATURES), dtype=jnp.float32)
    h0 = jax.random.normal(k_h0, (N, IN_FEATURES), dtype=jnp.float32)

    # weight ~ U(-stdv, stdv), stdv = 1/sqrt(out_features)  (reset_parameters)
    stdv = 1.0 / math.sqrt(OUT_FEATURES)
    weight = jax.random.uniform(
        k_w, (IN_FEATURES, OUT_FEATURES), dtype=jnp.float32,
        minval=-stdv, maxval=stdv)

    # BatchNorm1d affine params at their PyTorch init values
    gamma = jnp.ones((OUT_FEATURES,), dtype=jnp.float32)
    beta = jnp.zeros((OUT_FEATURES,), dtype=jnp.float32)

    ref = reference(x, h0, weight, gamma, beta)

    # f32 MXU path (v5e-style / validation): tight tolerance.
    out_f32 = residual_layer(x, h0, weight, gamma, beta,
                             compute_dtype=jnp.float32)
    jax.block_until_ready(out_f32)
    assert out_f32.shape == (N, OUT_FEATURES)
    assert jnp.allclose(out_f32, ref, atol=1e-4, rtol=1e-4)

    # bf16 MXU path (v6e/v7x fast path): looser tolerance vs f32 reference.
    out_bf16 = residual_layer(x, h0, weight, gamma, beta,
                              compute_dtype=jnp.bfloat16)
    jax.block_until_ready(out_bf16)
    assert out_bf16.shape == (N, OUT_FEATURES)
    assert jnp.allclose(out_bf16, ref, atol=5e-2, rtol=5e-2)

    print("KERNEL_OK")
</pallas_src>

<mosaic_0001>
module attributes {stable_mosaic.version = 11 : i64} {
  func.func @_mm_stats_kernel(%arg0: i32, %arg1: i32, %arg2: memref<8x128xf32, #tpu.memory_space<vmem>>, %arg3: memref<8x128xf32, #tpu.memory_space<vmem>>, %arg4: memref<128x128xf32, #tpu.memory_space<vmem>>, %arg5: memref<8x128xf32, #tpu.memory_space<vmem>>, %arg6: memref<1x128xf32, #tpu.memory_space<vmem>>, %arg7: memref<1x128xf32, #tpu.memory_space<vmem>>) attributes {dimension_semantics = [#tpu.dimension_semantics<arbitrary>, #tpu.dimension_semantics<arbitrary>], iteration_bounds = array<i64: 1, 1>, scalar_prefetch = 0 : i64, scratch_operands = 0 : i64, tpu.core_type = #tpu.core_type<tc>, window_params = [{transform_indices = @transform_0, window_bounds = array<i64: 8, 128>}, {transform_indices = @transform_1, window_bounds = array<i64: 8, 128>}, {transform_indices = @transform_2, window_bounds = array<i64: 128, 128>}, {transform_indices = @transform_3, window_bounds = array<i64: 8, 128>}, {pipeline_mode = #tpu.pipeline_mode<synchronous>, transform_indices = @transform_4, window_bounds = array<i64: 1, 128>}, {pipeline_mode = #tpu.pipeline_mode<synchronous>, transform_indices = @transform_5, window_bounds = array<i64: 1, 128>}]} {
    %c0_i32 = arith.constant 0 : i32
    %0 = arith.cmpi eq, %arg0, %c0_i32 : i32
    %c0_i32_0 = arith.constant 0 : i32
    %1 = arith.cmpi eq, %arg1, %c0_i32_0 : i32
    %2 = arith.andi %0, %1 : i1
    %3 = arith.extui %2 : i1 to i32
    %c0_i32_1 = arith.constant 0 : i32
    %4 = arith.cmpi ne, %3, %c0_i32_1 : i32
    scf.if %4 {
      %cst_15 = arith.constant 0.000000e+00 : f32
      %19 = vector.broadcast %cst_15 : f32 to vector<1x128xf32>
      %c0_16 = arith.constant 0 : index
      %c0_17 = arith.constant 0 : index
      %20 = vector.load %arg6[%c0_16, %c0_17] : memref<1x128xf32, #tpu.memory_space<vmem>>, vector<1x128xf32>
      tpu.vector_store %arg6[%c0_16, %c0_17], %19 {strides = array<i32>} : memref<1x128xf32, #tpu.memory_space<vmem>>, vector<1x128xf32>,
      %cst_18 = arith.constant 0.000000e+00 : f32
      %21 = vector.broadcast %cst_18 : f32 to vector<1x128xf32>
      %c0_19 = arith.constant 0 : index
      %c0_20 = arith.constant 0 : index
      %22 = vector.load %arg7[%c0_19, %c0_20] : memref<1x128xf32, #tpu.memory_space<vmem>>, vector<1x128xf32>
      tpu.vector_store %arg7[%c0_19, %c0_20], %21 {strides = array<i32>} : memref<1x128xf32, #tpu.memory_space<vmem>>, vector<1x128xf32>,
    } else {
    }
    %c0_i32_2 = arith.constant 0 : i32
    %5 = arith.cmpi eq, %arg1, %c0_i32_2 : i32
    %6 = arith.extui %5 : i1 to i32
    %c0_i32_3 = arith.constant 0 : i32
    %7 = arith.cmpi ne, %6, %c0_i32_3 : i32
    scf.if %7 {
      %cst_15 = arith.constant 0.000000e+00 : f32
      %19 = vector.broadcast %cst_15 : f32 to vector<8x128xf32>
      %c0_16 = arith.constant 0 : index
      %c0_17 = arith.constant 0 : index
      %20 = vector.load %arg5[%c0_16, %c0_17] : memref<8x128xf32, #tpu.memory_space<vmem>>, vector<8x128xf32>
      tpu.vector_store %arg5[%c0_16, %c0_17], %19 {strides = array<i32>} : memref<8x128xf32, #tpu.memory_space<vmem>>, vector<8x128xf32>,
    } else {
    }
    %c0 = arith.constant 0 : index
    %c0_4 = arith.constant 0 : index
    %8 = vector.load %arg2[%c0, %c0_4] : memref<8x128xf32, #tpu.memory_space<vmem>>, vector<8x128xf32>
    %c0_5 = arith.constant 0 : index
    %c0_6 = arith.constant 0 : index
    %9 = vector.load %arg3[%c0_5, %c0_6] : memref<8x128xf32, #tpu.memory_space<vmem>>, vector<8x128xf32>
    %10 = arith.addf %8, %9 : vector<8x128xf32>
    %c0_7 = arith.constant 0 : index
    %c0_8 = arith.constant 0 : index
    %11 = vector.load %arg5[%c0_7, %c0_8] : memref<8x128xf32, #tpu.memory_space<vmem>>, vector<8x128xf32>
    %c0_9 = arith.constant 0 : index
    %c0_10 = arith.constant 0 : index
    %12 = vector.load %arg4[%c0_9, %c0_10] : memref<128x128xf32, #tpu.memory_space<vmem>>, vector<128x128xf32>
    %cst = arith.constant dense<0.000000e+00> : vector<8x128xf32>
    %13 = tpu.matmul %10, %12, %cst {dimension_numbers = #tpu.dot_dimension_numbers<[1], [0], [0], [1], [0, 0, 1, 1], [], []>} : vector<8x128xf32>, vector<128x128xf32>, vector<8x128xf32> -> vector<8x128xf32>
    %14 = arith.addf %11, %13 : vector<8x128xf32>
    %c0_11 = arith.constant 0 : index
    %c0_12 = arith.constant 0 : index
    %15 = vector.load %arg5[%c0_11, %c0_12] : memref<8x128xf32, #tpu.memory_space<vmem>>, vector<8x128xf32>
    tpu.vector_store %arg5[%c0_11, %c0_12], %14 {strides = array<i32>} : memref<8x128xf32, #tpu.memory_space<vmem>>, vector<8x128xf32>,
    %c0_i32_13 = arith.constant 0 : i32
    %16 = arith.cmpi eq, %arg1, %c0_i32_13 : i32
    %17 = arith.extui %16 : i1 to i32
    %c0_i32_14 = arith.constant 0 : i32
    %18 = arith.cmpi ne, %17, %c0_i32_14 : i32
    scf.if %18 {
      %c0_15 = arith.constant 0 : index
      %c0_16 = arith.constant 0 : index
      %19 = vector.load %arg5[%c0_15, %c0_16] : memref<8x128xf32, #tpu.memory_space<vmem>>, vector<8x128xf32>
      %c0_17 = arith.constant 0 : index
      %c0_18 = arith.constant 0 : index
      %20 = vector.load %arg6[%c0_17, %c0_18] : memref<1x128xf32, #tpu.memory_space<vmem>>, vector<1x128xf32>
      %cst_19 = arith.constant dense<0.000000e+00> : vector<128xf32>
      %21 = vector.multi_reduction <add>, %19, %cst_19 [0] : vector<8x128xf32> to vector<128xf32>
      %22 = vector.shape_cast %21 : vector<128xf32> to vector<1x128xf32>
      %23 = arith.addf %20, %22 : vector<1x128xf32>
      %c0_20 = arith.constant 0 : index
      %c0_21 = arith.constant 0 : index
      %24 = vector.load %arg6[%c0_20, %c0_21] : memref<1x128xf32, #tpu.memory_space<vmem>>, vector<1x128xf32>
      tpu.vector_store %arg6[%c0_20, %c0_21], %23 {strides = array<i32>} : memref<1x128xf32, #tpu.memory_space<vmem>>, vector<1x128xf32>,
      %c0_22 = arith.constant 0 : index
      %c0_23 = arith.constant 0 : index
      %25 = vector.load %arg7[%c0_22, %c0_23] : memref<1x128xf32, #tpu.memory_space<vmem>>, vector<1x128xf32>
      %26 = arith.mulf %19, %19 : vector<8x128xf32>
      %cst_24 = arith.constant dense<0.000000e+00> : vector<128xf32>
      %27 = vector.multi_reduction <add>, %26, %cst_24 [0] : vector<8x128xf32> to vector<128xf32>
      %28 = vector.shape_cast %27 : vector<128xf32> to vector<1x128xf32>
      %29 = arith.addf %25, %28 : vector<1x128xf32>
      %c0_25 = arith.constant 0 : index
      %c0_26 = arith.constant 0 : index
      %30 = vector.load %arg7[%c0_25, %c0_26] : memref<1x128xf32, #tpu.memory_space<vmem>>, vector<1x128xf32>
      tpu.vector_store %arg7[%c0_25, %c0_26], %29 {strides = array<i32>} : memref<1x128xf32, #tpu.memory_space<vmem>>, vector<1x128xf32>,
    } else {
    }
    return
  }
  func.func @transform_0(%arg0: i32, %arg1: i32) -> (i32, i32) {
    %c0_i32 = arith.constant 0 : i32
    return %arg0, %arg1 : i32, i32
  }
  func.func @transform_1(%arg0: i32, %arg1: i32) -> (i32, i32) {
    %c0_i32 = arith.constant 0 : i32
    return %arg0, %arg1 : i32, i32
  }
  func.func @transform_2(%arg0: i32, %arg1: i32) -> (i32, i32) {
    %c0_i32 = arith.constant 0 : i32
    %c0_i32_0 = arith.constant 0 : i32
    return %arg1, %c0_i32 : i32, i32
  }
  func.func @transform_3(%arg0: i32, %arg1: i32) -> (i32, i32) {
    %c0_i32 = arith.constant 0 : i32
    %c0_i32_0 = arith.constant 0 : i32
    return %arg0, %c0_i32 : i32, i32
  }
  func.func @transform_4(%arg0: i32, %arg1: i32) -> (i32, i32) {
    %c0_i32 = arith.constant 0 : i32
    %c0_i32_0 = arith.constant 0 : i32
    %c0_i32_1 = arith.constant 0 : i32
    return %c0_i32, %c0_i32_0 : i32, i32
  }
  func.func @transform_5(%arg0: i32, %arg1: i32) -> (i32, i32) {
    %c0_i32 = arith.constant 0 : i32
    %c0_i32_0 = arith.constant 0 : i32
    %c0_i32_1 = arith.constant 0 : i32
    return %c0_i32, %c0_i32_0 : i32, i32
  }
}

</mosaic_0001>

<llo_original>
// kernel: tpu_custom_call.1
$region0: #{tpu_custom_call.1}
  #allocation0 [shape = 'u32[]', space=smem, size = 0x4, offset = 0x4, fixed_abs, tag = 'smem constant byte address 0x4 - core index']
  #allocation1 [shape = 'u32[72,128]{1,0:T(1,128)}', space=vmem, size = 0x9000, scoped, tag = 'internal scratch']
  %s0 = inlined_call_operand.hbm [shape: f32[8,128], index: 0, kind: input, shape index: {}]
  %s1 = inlined_call_operand.hbm [shape: f32[8,128], index: 1, kind: input, shape index: {}]
  %s2 = inlined_call_operand.hbm [shape: f32[128,128], index: 2, kind: input, shape index: {}]
  %s3 = inlined_call_operand.hbm [shape: f32[8,128], index: 3, kind: output, shape index: {0}]
  %s4 = inlined_call_operand.hbm [shape: f32[1,128], index: 4, kind: output, shape index: {1}]
  %s5 = inlined_call_operand.hbm [shape: f32[1,128], index: 5, kind: output, shape index: {2}]
  %6 = xla_tuple %s3, %s4, %s5
  %s7 = sld [smem:[#allocation0]]
  $region62: #{tpu_custom_call.1} parent=0
    _
  %s9 = ssub.s32 1, %s7
  %s10 = scalar_select 0, %s9, %s7
  $region1: #{tpu_custom_call.1} parent=0
    #allocation2 [shape = 'u8[4096]{0}', space=vmem, size = 0x1000, scoped, tag = 'input window, operand 0, single buffered']
    #allocation3 [shape = 's32[1]{0}', space=sflag, size = 0x4, scoped, tag = 'scoped memory for tpu_custom_call.1']
    #allocation4 [shape = 's32[1]{0}', space=sflag, size = 0x4, scoped, tag = 'scoped memory for tpu_custom_call.1']
    #allocation5 [shape = 'u8[4096]{0}', space=vmem, size = 0x1000, scoped, tag = 'input window, operand 1, single buffered']
    #allocation6 [shape = 's32[1]{0}', space=sflag, size = 0x4, scoped, tag = 'scoped memory for tpu_custom_call.1']
    #allocation7 [shape = 'u8[65536]{0}', space=vmem, size = 0x10000, scoped, tag = 'input window, operand 2, single buffered']
    #allocation8 [shape = 'u8[4096]{0}', space=vmem, size = 0x1000, scoped, tag = 'output window, operand 0, single buffered']
    #allocation9 [shape = 'u8[512]{0}', space=vmem, size = 0x400, scoped, tag = 'output window, operand 1, single buffered']
    #allocation10 [shape = 's32[1]{0}', space=sflag, size = 0x4, scoped, tag = 'scoped memory for tpu_custom_call.1']
    #allocation11 [shape = 'u8[512]{0}', space=vmem, size = 0x400, scoped, tag = 'output window, operand 2, single buffered']
    %11 = vsyncpa [#allocation3], 0
    %12 = vsyncpa [#allocation6], 0
    %13 = vsyncpa [#allocation4], 0
    %14 = vsyncpa [#allocation10], 0
    // Predicated region
    $region2: #{tpu_custom_call.1} parent=1 // pred_check
      _
    $region3: #{tpu_custom_call.1} parent=1 // pred_check_branch
      %16 = sbr.rel (0) target = $region5
    $region4: #{tpu_custom_call.1} parent=1 // pred_region
      %18 = vsyncadd [#allocation3], 0
      %s20 = sshll.u32 %s0, 4
      %s21 = int_to_ptr.hbm [resolvable:$true] %s20
      %s22 = sshll.u32 [#allocation2], 4
      %s23 = int_to_ptr.vmem [resolvable:$true] %s22
      %25 = dma.hbm_to_vmem [thread:$0]  %s21, 128, %s23, [#allocation3]
    $region5: #{tpu_custom_call.1} parent=1 // pred_fallthru
      _
    // Predicated region
    $region6: #{tpu_custom_call.1} parent=1 // pred_check
      _
    $region7: #{tpu_custom_call.1} parent=1 // pred_check_branch
      %27 = sbr.rel (0) target = $region9
    $region8: #{tpu_custom_call.1} parent=1 // pred_region
      %29 = vsyncadd [#allocation6], 0
      %s31 = sshll.u32 %s1, 4
      %s32 = int_to_ptr.hbm [resolvable:$true] %s31
      %s33 = sshll.u32 [#allocation5], 4
      %s34 = int_to_ptr.vmem [resolvable:$true] %s33
      %36 = dma.hbm_to_vmem [thread:$0]  %s32, 128, %s34, [#allocation6]
    $region9: #{tpu_custom_call.1} parent=1 // pred_fallthru
      _
    // Predicated region
    $region10: #{tpu_custom_call.1} parent=1 // pred_check
      _
    $region11: #{tpu_custom_call.1} parent=1 // pred_check_branch
      %38 = sbr.rel (0) target = $region13
    $region12: #{tpu_custom_call.1} parent=1 // pred_region
      %40 = vsyncadd [#allocation6], 0
      %s41 = sshll.u32 %s2, 4
      %s42 = int_to_ptr.hbm [resolvable:$true] %s41
      %s43 = sshll.u32 [#allocation7], 4
      %s44 = int_to_ptr.vmem [resolvable:$true] %s43
      %49 = dma.hbm_to_vmem [thread:$0]  %s42, 2048, %s44, [#allocation6], 128, 128, 8
    $region13: #{tpu_custom_call.1} parent=1 // pred_fallthru
      _
    // Predicated region
    $region14: #{tpu_custom_call.1} parent=1 // pred_check
      _
    $region15: #{tpu_custom_call.1} parent=1 // pred_check_branch
      %51 = sbr.rel (0) target = $region17
    $region16: #{tpu_custom_call.1} parent=1 // pred_region
      %53 = dma.done [#allocation3], 128
    $region17: #{tpu_custom_call.1} parent=1 // pred_fallthru
      _
    // Predicated region
    $region18: #{tpu_custom_call.1} parent=1 // pred_check
      _
    $region19: #{tpu_custom_call.1} parent=1 // pred_check_branch
      %55 = sbr.rel (0) target = $region21
    $region20: #{tpu_custom_call.1} parent=1 // pred_region
      %57 = dma.done [#allocation6], 128
    $region21: #{tpu_custom_call.1} parent=1 // pred_fallthru
      _
    // Predicated region
    $region22: #{tpu_custom_call.1} parent=1 // pred_check
      _
    $region23: #{tpu_custom_call.1} parent=1 // pred_check_branch
      %59 = sbr.rel (0) target = $region25
    $region24: #{tpu_custom_call.1} parent=1 // pred_region
      %61 = dma.done [#allocation6], 2048
    $region25: #{tpu_custom_call.1} parent=1 // pred_fallthru
      _
    %p62 = scmp.eq.s32.totalorder 0, 0
    %p63 = scmp.eq.s32.totalorder 0, 0
    %p64 = pnand %p62, %p63
    %p65 = pneg %p64
    // Predicated region
    $region26: #{tpu_custom_call.1} parent=1 // pred_check
      _
    $region27: #{tpu_custom_call.1} parent=1 // pred_check_branch
      %67 = sbr.rel (%p64) target = $region29
    $region28: #{tpu_custom_call.1} parent=1 // pred_region
      %68 = vst [vmem:[#allocation9] sm:$0x1] 0.0
      %69 = vst [vmem:[#allocation11] sm:$0x1] 0.0
    $region29: #{tpu_custom_call.1} parent=1 // pred_fallthru
      _
    // Predicated region
    $region30: #{tpu_custom_call.1} parent=1 // pred_check
      %p70 = pneg %p63
    $region31: #{tpu_custom_call.1} parent=1 // pred_check_branch
      %72 = sbr.rel (%p70) target = $region33
    $region32: #{tpu_custom_call.1} parent=1 // pred_region
      %73 = vst [vmem:[#allocation8] sm:$0xff] 0.0
    $region33: #{tpu_custom_call.1} parent=1 // pred_fallthru
      _
    %v74 = vld [vmem:[#allocation2] sm:$0xff]
    %v75 = vld [vmem:[#allocation5] sm:$0xff]
    %v76 = vadd.f32 %v74, %v75
    %v77 = vld [vmem:[#allocation8] sm:$0xff]
    %v78 = vld [vmem:[#allocation7] sm:$0xff]
    %v79 = vld [vmem:[#allocation7 + $0x8] sm:$0xff]
    %v80 = vld [vmem:[#allocation7 + $0x10] sm:$0xff]
    %v81 = vld [vmem:[#allocation7 + $0x18] sm:$0xff]
    %v82 = vld [vmem:[#allocation7 + $0x20] sm:$0xff]
    %v83 = vld [vmem:[#allocation7 + $0x28] sm:$0xff]
    %v84 = vld [vmem:[#allocation7 + $0x30] sm:$0xff]
    %v85 = vld [vmem:[#allocation7 + $0x38] sm:$0xff]
    %v86 = vld [vmem:[#allocation7 + $0x40] sm:$0xff]
    %v87 = vld [vmem:[#allocation7 + $0x48] sm:$0xff]
    %v88 = vld [vmem:[#allocation7 + $0x50] sm:$0xff]
    %v89 = vld [vmem:[#allocation7 + $0x58] sm:$0xff]
    %v90 = vld [vmem:[#allocation7 + $0x60] sm:$0xff]
    %v91 = vld [vmem:[#allocation7 + $0x68] sm:$0xff]
    %v92 = vld [vmem:[#allocation7 + $0x70] sm:$0xff]
    %v93 = vld [vmem:[#allocation7 + $0x78] sm:$0xff]
    %94 = vmatpush.msra.mxu0 %v93
    %95 = vmatpush.msra.mxu0 %v92
    %96 = vmatpush.msra.mxu0 %v91
    %97 = vmatpush.msra.mxu0 %v90
    %98 = vmatpush.msra.mxu0 %v89
    %99 = vmatpush.msra.mxu0 %v88
    %100 = vmatpush.msra.mxu0 %v87
    %101 = vmatpush.msra.mxu0 %v86
    %102 = vmatpush.msra.mxu0 %v85
    %103 = vmatpush.msra.mxu0 %v84
    %104 = vmatpush.msra.mxu0 %v83
    %105 = vmatpush.msra.mxu0 %v82
    %106 = vmatpush.msra.mxu0 %v81
    %107 = vmatpush.msra.mxu0 %v80
    %108 = vmatpush.msra.mxu0 %v79
    %109 = vmatpush.msra.mxu0 %v78
    %110 = vmatmul.f32.gmra.mxu0 %v76
    %v111 = vpop.f32.mrf.mxu0
    %v112 = vadd.f32 0.0, %v111
    %113 = vdwg.mxu0
    %v114 = vadd.f32 %v77, %v112
    %115 = vst [vmem:[#allocation8] sm:$0xff] %v114
    // Predicated region
    $region34: #{tpu_custom_call.1} parent=1 // pred_check
      %p116 = pneg %p63
    $region35: #{tpu_custom_call.1} parent=1 // pred_check_branch
      %118 = sbr.rel (%p116) target = $region37
    $region36: #{tpu_custom_call.1} parent=1 // pred_region
      %v119 = vld [vmem:[#allocation8] sm:$0xff]
      %v120 = vld [vmem:[#allocation9] sm:$0x1]
      %v121 = vrot.slane %v119, 4
      %v122 = vadd.f32 %v119, %v121
      %v123 = vrot.slane %v122, 2
      %v124 = vadd.f32 %v122, %v123
      %v125 = vrot.slane %v124, 1
      %v126 = vadd.f32 %v124, %v125
      %v127 = vadd.f32 %v120, %v126
      %128 = vst [vmem:[#allocation9] sm:$0x1] %v127
      %v129 = vld [vmem:[#allocation11] sm:$0x1]
      %v130 = vmul.f32 %v119, %v119
      %v131 = vrot.slane %v130, 4
      %v132 = vadd.f32 %v130, %v131
      %v133 = vrot.slane %v132, 2
      %v134 = vadd.f32 %v132, %v133
      %v135 = vrot.slane %v134, 1
      %v136 = vadd.f32 %v134, %v135
      %v137 = vadd.f32 %v129, %v136
      %138 = vst [vmem:[#allocation11] sm:$0x1] %v137
    $region37: #{tpu_custom_call.1} parent=1 // pred_fallthru
      _
    // Predicated region
    $region38: #{tpu_custom_call.1} parent=1 // pred_check
      _
    $region39: #{tpu_custom_call.1} parent=1 // pred_check_branch
      %140 = sbr.rel (0) target = $region41
    $region40: #{tpu_custom_call.1} parent=1 // pred_region
      %142 = vsyncadd [#allocation4], 0
      %s144 = sshll.u32 [#allocation8], 4
      %s145 = int_to_ptr.vmem [resolvable:$true] %s144
      %s146 = sshll.u32 %s3, 4
      %s147 = int_to_ptr.hbm [resolvable:$true] %s146
      %149 = dma.vmem_to_hbm [thread:$0]  %s145, 128, %s147, [#allocation4]
    $region41: #{tpu_custom_call.1} parent=1 // pred_fallthru
      _
    // Predicated region
    $region42: #{tpu_custom_call.1} parent=1 // pred_check
      _
    $region43: #{tpu_custom_call.1} parent=1 // pred_check_branch
      %151 = sbr.rel (0) target = $region45
    $region44: #{tpu_custom_call.1} parent=1 // pred_region
      %153 = vsyncadd [#allocation10], 0
      %s155 = sshll.u32 [#allocation9], 4
      %s156 = int_to_ptr.vmem [resolvable:$true] %s155
      %s157 = sshll.u32 %s4, 4
      %s158 = int_to_ptr.hbm [resolvable:$true] %s157
      %160 = dma.vmem_to_hbm [thread:$0]  %s156, 16, %s158, [#allocation10]
    $region45: #{tpu_custom_call.1} parent=1 // pred_fallthru
      _
    // Predicated region
    $region46: #{tpu_custom_call.1} parent=1 // pred_check
      _
    $region47: #{tpu_custom_call.1} parent=1 // pred_check_branch
      %162 = sbr.rel (0) target = $region49
    $region48: #{tpu_custom_call.1} parent=1 // pred_region
      %164 = vsyncadd [#allocation10], 0
      %s166 = sshll.u32 [#allocation11], 4
      %s167 = int_to_ptr.vmem [resolvable:$true] %s166
      %s168 = sshll.u32 %s5, 4
      %s169 = int_to_ptr.hbm [resolvable:$true] %s168
      %171 = dma.vmem_to_hbm [thread:$0]  %s167, 16, %s169, [#allocation10]
    $region49: #{tpu_custom_call.1} parent=1 // pred_fallthru
      _
    // Predicated region
    $region50: #{tpu_custom_call.1} parent=1 // pred_check
      _
    $region51: #{tpu_custom_call.1} parent=1 // pred_check_branch
      %173 = sbr.rel (0) target = $region53
    $region52: #{tpu_custom_call.1} parent=1 // pred_region
      %175 = dma.done [#allocation4], 128
    $region53: #{tpu_custom_call.1} parent=1 // pred_fallthru
      _
    // Predicated region
    $region54: #{tpu_custom_call.1} parent=1 // pred_check
      _
    $region55: #{tpu_custom_call.1} parent=1 // pred_check_branch
      %177 = sbr.rel (0) target = $region57
    $region56: #{tpu_custom_call.1} parent=1 // pred_region
      %179 = dma.done [#allocation10], 16
    $region57: #{tpu_custom_call.1} parent=1 // pred_fallthru
      _
    // Predicated region
    $region58: #{tpu_custom_call.1} parent=1 // pred_check
      _
    $region59: #{tpu_custom_call.1} parent=1 // pred_check_branch
      %181 = sbr.rel (0) target = $region61
    $region60: #{tpu_custom_call.1} parent=1 // pred_region
      %183 = dma.done [#allocation10], 16
    $region61: #{tpu_custom_call.1} parent=1 // pred_fallthru
      _
    %184 = vsyncpa [#allocation3], 1
    %185 = vsyncpa [#allocation6], 1
    %186 = vsyncpa [#allocation4], 1
    %187 = vsyncpa [#allocation10], 1

</llo_original>
